<compile_context>
chip_gen: v7x
topology: tpu7x:2x2x1
jax: 0.10.0
libtpu: 0.0.40
codegen_flags: <defaults>
</compile_context>

<pallas_src>
import functools
import math

import jax
import jax.numpy as jnp
import numpy as np
from jax.experimental import pallas as pl
from jax.experimental.pallas import tpu as pltpu


# ----------------------------------------------------------------------------
# Kernel: writes one (rows_per_block, W) tile of the sinusoidal table.
#
# Storage layout: row r, lane c  ->  position p = r*pos_per_row + (c // d),
#                                    feature  j = c % d
# inv_freq / phase / pos_off are precomputed (1, W) lane rows, so the kernel has
# no division/modulo and exactly one transcendental per element:
#   emb[p, j] = emb_scale * sin(p * inv_freq[j] + (j % 2) * pi/2)
# ----------------------------------------------------------------------------
def _pos_emb_kernel(inv_freq_ref, phase_ref, pos_off_ref, out_ref, *,
                    rows_per_block, pos_per_row, emb_scale):
    tr, w = out_ref.shape
    row0 = pl.program_id(0) * rows_per_block
    r = jax.lax.broadcasted_iota(jnp.int32, (tr, w), 0)            # row within block
    pos = ((row0 + r) * pos_per_row).astype(jnp.float32) + pos_off_ref[...]
    angle = pos * inv_freq_ref[...] + phase_ref[...]               # (1, W) broadcasts
    out_ref[...] = (jnp.float32(emb_scale) * jnp.sin(angle)).astype(out_ref.dtype)


# ----------------------------------------------------------------------------
# Wrapper
# ----------------------------------------------------------------------------
def positional_embedding(batch_size, max_len, d_word_vec, init_range=0.1,
                         dtype=jnp.float32):
    """Equivalent of PositionalEmbedding.forward(data=(batch_size, max_len))."""
    assert d_word_vec % 2 == 0
    L, d = int(max_len), int(d_word_vec)
    emb_scale = float(init_range) * d

    # ---- lane-dense storage layout: table stored as (R, W) with W = ppr * d ----
    # Fold ppr consecutive positions into one stored row so W % 128 == 0 when the
    # raw feature dim is narrower than 128 lanes (unmasked vst).  Falls back to the
    # plain (L, d) layout (ppr = 1) when no clean fold exists.
    ppr = 1
    if d % 128 != 0:
        for cand in range(2, 65):
            w_cand = cand * d
            if w_cand > 1024:
                break
            if w_cand % 128 == 0 and L % cand == 0:
                ppr = cand
                break
    W = ppr * d
    R = L // ppr

    # ---- compile-time constant (1, W) lane rows: frequency, phase, pos offset ----
    inv_freq_half = 1.0 / (10000.0 ** (np.arange(0, d, 2, dtype=np.float64) / d))
    inv_freq = np.repeat(inv_freq_half, 2).astype(np.float32)        # per feature j
    phase = np.tile(np.array([0.0, math.pi / 2.0], dtype=np.float32), d // 2)
    inv_freq_lane = jnp.asarray(np.tile(inv_freq, ppr)[None, :])      # (1, W)
    phase_lane = jnp.asarray(np.tile(phase, ppr)[None, :])            # (1, W)
    pos_off_lane = jnp.asarray(
        np.repeat(np.arange(ppr, dtype=np.float32), d)[None, :])      # (1, W)

    # ---- row tiling: multiple of 8 sublanes, <= ~4 MiB per output block ----
    max_rows = max(8, min(512, ((4 << 20) // (W * 4)) // 8 * 8))
    if R <= max_rows:
        rows_per_block, grid = R, (1,)
    else:
        rows_per_block, grid = max_rows, (pl.cdiv(R, max_rows),)

    table = pl.pallas_call(
        functools.partial(_pos_emb_kernel,
                          rows_per_block=rows_per_block,
                          pos_per_row=ppr,
                          emb_scale=emb_scale),
        grid=grid,
        in_specs=[pl.BlockSpec((1, W), lambda i: (0, 0)),
                  pl.BlockSpec((1, W), lambda i: (0, 0)),
                  pl.BlockSpec((1, W), lambda i: (0, 0))],
        out_specs=pl.BlockSpec((rows_per_block, W), lambda i: (i, 0)),
        out_shape=jax.ShapeDtypeStruct((R, W), dtype),
        compiler_params=pltpu.CompilerParams(
            # position-row tiles are independent -> v7x's two TCs split the work
            dimension_semantics=("parallel",)),
    )(inv_freq_lane, phase_lane, pos_off_lane)

    # (R, W) row-major is exactly (L, d) row-major: free reshape, then the batch
    # dimension is a pure broadcast (the reference's .expand()).
    table = table.reshape(L, d)
    return jnp.broadcast_to(table[None], (batch_size, L, d))


# ----------------------------------------------------------------------------
# Pure-numpy reference (mirrors the PyTorch sinusoidal branch exactly)
# ----------------------------------------------------------------------------
def _ref_positional_embedding(batch_size, max_len, d_word_vec, init_range=0.1):
    emb_scale = init_range * d_word_vec
    freq = 1.0 / (10000.0 ** (np.arange(0, d_word_vec, 2, dtype=np.float32)
                              / np.float32(d_word_vec)))
    pos = np.arange(max_len, dtype=np.float32)
    ang = pos[:, None] * freq[None, :]                       # (L, d/2)
    emb = np.stack([np.sin(ang), np.cos(ang)], axis=-1)      # interleave sin/cos
    emb = (emb * emb_scale).reshape(max_len, d_word_vec)
    return np.broadcast_to(emb[None], (batch_size, max_len, d_word_vec)).copy()


if __name__ == "__main__":
    # hparams (small, consistent with the module)
    B, L, D = 2, 8, 32
    INIT_RANGE = 0.1

    # The forward takes data=(batch_size, max_len) — only shapes matter.  Build a
    # deterministic dummy token batch just to derive those shapes.
    key = jax.random.PRNGKey(0)
    dummy_tokens = jax.random.randint(key, (B, L), 0, 100)
    data = dummy_tokens.shape  # (batch_size, max_len)

    out = positional_embedding(data[0], data[1], D, INIT_RANGE)
    out = jax.block_until_ready(out)

    ref = _ref_positional_embedding(B, L, D, INIT_RANGE)
    assert out.shape == (B, L, D)
    np.testing.assert_allclose(np.asarray(out), ref, rtol=1e-4, atol=1e-4)

    # Larger config: exercises the multi-block grid + lane-dense (d % 128 == 0)
    # path.  Loose tolerance: only guards against indexing/logic errors (TPU f32
    # sin range-reduction differs slightly from numpy at large angles).
    B2, L2, D2 = 1, 2048, 256
    out2 = jax.block_until_ready(positional_embedding(B2, L2, D2, INIT_RANGE))
    ref2 = _ref_positional_embedding(B2, L2, D2, INIT_RANGE)
    assert out2.shape == (B2, L2, D2)
    np.testing.assert_allclose(np.asarray(out2), ref2, rtol=0.0, atol=0.05)

    print("KERNEL_OK")
</pallas_src>

<mosaic_0001>
module attributes {stable_mosaic.version = 11 : i64} {
  func.func @_pos_emb_kernel(%arg0: i32, %arg1: memref<1x128xf32, #tpu.memory_space<vmem>>, %arg2: memref<1x128xf32, #tpu.memory_space<vmem>>, %arg3: memref<1x128xf32, #tpu.memory_space<vmem>>, %arg4: memref<2x128xf32, #tpu.memory_space<vmem>>) attributes {dimension_semantics = [#tpu.dimension_semantics<parallel>], iteration_bounds = array<i64: 1>, scalar_prefetch = 0 : i64, scratch_operands = 0 : i64, tpu.core_type = #tpu.core_type<tc>, window_params = [{pipeline_mode = #tpu.pipeline_mode<synchronous>, transform_indices = @transform_0, window_bounds = array<i64: 1, 128>}, {pipeline_mode = #tpu.pipeline_mode<synchronous>, transform_indices = @transform_1, window_bounds = array<i64: 1, 128>}, {pipeline_mode = #tpu.pipeline_mode<synchronous>, transform_indices = @transform_2, window_bounds = array<i64: 1, 128>}, {transform_indices = @transform_3, window_bounds = array<i64: 2, 128>}]} {
    %c2_i32 = arith.constant 2 : i32
    %0 = arith.muli %arg0, %c2_i32 : i32
    %1 = tpu.iota {dimensions = array<i32: 0>} : vector<2x128xi32>
    %2 = vector.broadcast %0 : i32 to vector<2x128xi32>
    %3 = arith.addi %2, %1 : vector<2x128xi32>
    %c4_i32 = arith.constant 4 : i32
    %4 = vector.broadcast %c4_i32 : i32 to vector<2x128xi32>
    %5 = arith.muli %3, %4 : vector<2x128xi32>
    %6 = arith.sitofp %5 : vector<2x128xi32> to vector<2x128xf32>
    %c0 = arith.constant 0 : index
    %c0_0 = arith.constant 0 : index
    %7 = vector.load %arg3[%c0, %c0_0] : memref<1x128xf32, #tpu.memory_space<vmem>>, vector<1x128xf32>
    %8 = vector.broadcast %7 : vector<1x128xf32> to vector<2x128xf32>
    %9 = arith.addf %6, %8 : vector<2x128xf32>
    %c0_1 = arith.constant 0 : index
    %c0_2 = arith.constant 0 : index
    %10 = vector.load %arg1[%c0_1, %c0_2] : memref<1x128xf32, #tpu.memory_space<vmem>>, vector<1x128xf32>
    %11 = vector.broadcast %10 : vector<1x128xf32> to vector<2x128xf32>
    %12 = arith.mulf %9, %11 : vector<2x128xf32>
    %c0_3 = arith.constant 0 : index
    %c0_4 = arith.constant 0 : index
    %13 = vector.load %arg2[%c0_3, %c0_4] : memref<1x128xf32, #tpu.memory_space<vmem>>, vector<1x128xf32>
    %14 = vector.broadcast %13 : vector<1x128xf32> to vector<2x128xf32>
    %15 = arith.addf %12, %14 : vector<2x128xf32>
    %16 = math.sin %15 : vector<2x128xf32>
    %cst = arith.constant 3.200000e+00 : f32
    %17 = vector.broadcast %cst : f32 to vector<2x128xf32>
    %18 = arith.mulf %17, %16 : vector<2x128xf32>
    %c0_5 = arith.constant 0 : index
    %c0_6 = arith.constant 0 : index
    %19 = vector.load %arg4[%c0_5, %c0_6] : memref<2x128xf32, #tpu.memory_space<vmem>>, vector<2x128xf32>
    tpu.vector_store %arg4[%c0_5, %c0_6], %18 {strides = array<i32>} : memref<2x128xf32, #tpu.memory_space<vmem>>, vector<2x128xf32>,
    return
  }
  func.func @transform_0(%arg0: i32) -> (i32, i32) {
    %c0_i32 = arith.constant 0 : i32
    %c0_i32_0 = arith.constant 0 : i32
    %c0_i32_1 = arith.constant 0 : i32
    return %c0_i32, %c0_i32_0 : i32, i32
  }
  func.func @transform_1(%arg0: i32) -> (i32, i32) {
    %c0_i32 = arith.constant 0 : i32
    %c0_i32_0 = arith.constant 0 : i32
    %c0_i32_1 = arith.constant 0 : i32
    return %c0_i32, %c0_i32_0 : i32, i32
  }
  func.func @transform_2(%arg0: i32) -> (i32, i32) {
    %c0_i32 = arith.constant 0 : i32
    %c0_i32_0 = arith.constant 0 : i32
    %c0_i32_1 = arith.constant 0 : i32
    return %c0_i32, %c0_i32_0 : i32, i32
  }
  func.func @transform_3(%arg0: i32) -> (i32, i32) {
    %c0_i32 = arith.constant 0 : i32
    %c0_i32_0 = arith.constant 0 : i32
    return %arg0, %c0_i32 : i32, i32
  }
}

</mosaic_0001>

<llo_original>
// kernel: tpu_custom_call.1
$region0: #{tpu_custom_call.1}
  #allocation0 [shape = 'u32[]', space=smem, size = 0x4, offset = 0x4, fixed_abs, tag = 'smem constant byte address 0x4 - core index']
  #allocation1 [shape = 'u32[144,128]{1,0:T(1,128)}', space=vmem, size = 0x12000, scoped, tag = 'internal scratch']
  %s0 = inlined_call_operand.hbm [shape: f32[1,128], index: 0, kind: input, shape index: {}]
  %s1 = inlined_call_operand.vmem [shape: f32[1,128], index: 1, kind: input, shape index: {}]
  %s2 = inlined_call_operand.vmem [shape: f32[1,128], index: 2, kind: input, shape index: {}]
  %s3 = inlined_call_operand.hbm [shape: f32[2,128], index: 3, kind: output, shape index: {}]
  %s4 = sld [smem:[#allocation0]]
  $region26: #{tpu_custom_call.1} parent=0
    _
  %s6 = ssub.s32 1, %s4
  %s7 = scalar_select 0, %s6, %s4
  $region1: #{tpu_custom_call.1} parent=0
    #allocation2 [shape = 'u8[512]{0}', space=vmem, size = 0x400, scoped, tag = 'input window, operand 0, single buffered']
    #allocation3 [shape = 's32[1]{0}', space=sflag, size = 0x4, scoped, tag = 'scoped memory for tpu_custom_call.1']
    #allocation4 [shape = 's32[1]{0}', space=sflag, size = 0x4, scoped, tag = 'scoped memory for tpu_custom_call.1']
    #allocation5 [shape = 'u8[1024]{0}', space=vmem, size = 0x400, scoped, tag = 'output window, operand 0, single buffered']
    %8 = vsyncpa [#allocation3], 0
    %9 = vsyncpa [#allocation4], 0
    // Predicated region
    $region2: #{tpu_custom_call.1} parent=1 // pred_check
      _
    $region3: #{tpu_custom_call.1} parent=1 // pred_check_branch
      %11 = sbr.rel (0) target = $region5
    $region4: #{tpu_custom_call.1} parent=1 // pred_region
      %s13 = ssub.s32 16, 16
      %14 = vsyncadd [#allocation3], %s13
      %s16 = sshll.u32 [#allocation2], 4
      %s17 = int_to_ptr.vmem [resolvable:$true] %s16
      %19 = dma.hbm_to_vmem [thread:$0]  %s0, 16, %s17, [#allocation3]
    $region5: #{tpu_custom_call.1} parent=1 // pred_fallthru
      _
    // Predicated region
    $region6: #{tpu_custom_call.1} parent=1 // pred_check
      _
    $region7: #{tpu_custom_call.1} parent=1 // pred_check_branch
      %21 = sbr.rel (0) target = $region9
    $region8: #{tpu_custom_call.1} parent=1 // pred_region
      _
    $region9: #{tpu_custom_call.1} parent=1 // pred_fallthru
      _
    // Predicated region
    $region10: #{tpu_custom_call.1} parent=1 // pred_check
      _
    $region11: #{tpu_custom_call.1} parent=1 // pred_check_branch
      %23 = sbr.rel (0) target = $region13
    $region12: #{tpu_custom_call.1} parent=1 // pred_region
      _
    $region13: #{tpu_custom_call.1} parent=1 // pred_fallthru
      _
    // Predicated region
    $region14: #{tpu_custom_call.1} parent=1 // pred_check
      _
    $region15: #{tpu_custom_call.1} parent=1 // pred_check_branch
      %25 = sbr.rel (0) target = $region17
    $region16: #{tpu_custom_call.1} parent=1 // pred_region
      %26 = dma.done [#allocation3], 16
    $region17: #{tpu_custom_call.1} parent=1 // pred_fallthru
      _
    %s27 = smul.u32 0, 2
    %v28 = vlaneseq
    %v29 = vshrl.u32 %v28, 7
    %v30 = vstv %s27
    %v31 = vadd.s32 %v30, %v29
    %v32 = vmul.u32 %v31, 4
    %v33 = vcvt.s32.f32 %v32
    %v34 = vld [vmem:[%s2] sm:$0x1]
    %v36 = vlaneseq
    %v37 = vshrl.u32 %v36, 7
    %v38 = vsub.s32 0, %v37
    %v39 = vrot.slane %v34, %v38
    %v41 = vadd.f32 %v33, %v39
    %v42 = vld [vmem:[#allocation2] sm:$0x1]
    %v44 = vlaneseq
    %v45 = vshrl.u32 %v44, 7
    %v46 = vsub.s32 0, %v45
    %v47 = vrot.slane %v42, %v46
    %v49 = vmul.f32 %v41, %v47
    %v50 = vld [vmem:[%s1] sm:$0x1]
    %v52 = vlaneseq
    %v53 = vshrl.u32 %v52, 7
    %v54 = vsub.s32 0, %v53
    %v55 = vrot.slane %v50, %v54
    %v57 = vadd.f32 %v49, %v55
    %v58 = vand.u32 2147483647, %v57
    %vm59 = vcmp.le.f32.partialorder %v58, 0.7853982
    %vm60 = vcmp.lt.s32.totalorder %v57, 0
    %v61 = vand.u32 %v57, 2139095040
    %v62 = vshrl.u32 %v61, 23
    %v63 = vsub.s32 %v62, 127
    %v64 = vand.u32 2147483647, %v57
    %v65 = vand.u32 %v64, 8388607
    %v66 = vor.u32 %v65, 8388608
    %v67 = vsub.s32 0, %v66
    %v68 = vadd.s32 %v63, 1
    %vm69 = vcmp.gt.s32.totalorder %v68, 0
    %v70 = vsel %vm69, %v68, 0
    %v71 = vshrl.u32 %v70, 5
    %v72 = vand.u32 %v70, 31
    %v73 = vsub.s32 32, %v72
    %v74 = vshrl.u32 683565275, %v73
    %v75 = vshll.u32 683565275, %v72
    %v76 = vshrl.u32 2475754826, %v73
    %v77 = vor.u32 %v75, %v76
    %v78 = vshll.u32 2475754826, %v72
    %v79 = vshrl.u32 2131351028, %v73
    %v80 = vor.u32 %v78, %v79
    %v81 = vshll.u32 2131351028, %v72
    %v82 = vshrl.u32 2102212464, %v73
    %v83 = vor.u32 %v81, %v82
    %v84 = vshll.u32 2102212464, %v72
    %v85 = vshrl.u32 920167782, %v73
    %v86 = vor.u32 %v84, %v85
    %v87 = vshll.u32 920167782, %v72
    %v88 = vshrl.u32 1326507024, %v73
    %v89 = vor.u32 %v87, %v88
    %vm90 = vcmp.lt.s32.totalorder %v71, 1
    %vm91 = vcmp.lt.s32.totalorder %v71, 2
    %vm92 = vcmp.lt.s32.totalorder %v71, 3
    %vm93 = vcmp.lt.s32.totalorder %v71, 4
    %v94 = vsel %vm90, %v74, %v77
    %v95 = vsel %vm93, %v83, 2102212464
    %v96 = vsel %vm92, %v80, %v95
    %v97 = vsel %vm91, %v94, %v96
    %v98 = vsel %vm90, %v77, %v80
    %v99 = vsel %vm93, %v86, 920167782
    %v100 = vsel %vm92, %v83, %v99
    %v101 = vsel %vm91, %v98, %v100
    %v102 = vsel %vm90, %v80, %v83
    %v103 = vsel %vm93, %v89, 1326507024
    %v104 = vsel %vm92, %v86, %v103
    %v105 = vsel %vm91, %v102, %v104
    %v106 = vshll.u32 %v66, 8
    %v107 = vmul.u32.u64.compose %v106, %v105
    %v108 = vextract.low.u32 %v107
    %v109 = vextract.high.u32 %v107
    %v110 = vmul.u32.u64.compose %v106, %v101
    %v111 = vextract.low.u32 %v110
    %v112 = vextract.high.u32 %v110
    %v113 = vmul.u32 %v106, %v97
    %v114 = vadd.s32 %v109, %v111
    %vm115 = vc.u32 %v109, %v111
    %v116 = vadd.s32 %v112, 1
    %v117 = vsel %vm115, %v116, %v112
    %v118 = vadd.s32 %v113, %v117
    %v119 = vadd.s32 %v118, 536870912
    %v120 = vshrl.u32 %v119, 30
    %v121 = vshll.u32 %v120, 30
    %v122 = vsub.s32 %v118, %v121
    %vm123 = vcmp.lt.s32.totalorder %v122, 0
    %v124 = vsub.s32 0, %v122
    %v125 = vsel %vm123, %v124, %v122
    %v126 = vclz %v125
    %v127 = vsub.s32 %v126, 2
    %vm128 = vcmp.gt.s32.totalorder 0, %v127
    %v129 = vsel %vm128, 0, %v127
    %v130 = vsub.s32 32, %v129
    %v131 = vshll.u32 %v122, %v129
    %v132 = vshrl.u32 %v114, %v130
    %v133 = vor.u32 %v131, %v132
    %v134 = vsub.s32 4294967266, %v129
    %v135 = vadd.s32 %v134, 127
    %v136 = vshll.u32 %v135, 23
    %v137 = vor.u32 4788187, %v136
    %v138 = vand.u32 2147483647, %v137
    %v140 = vcvt.s32.f32 %v133
    %v141 = vmul.f32 %v140, %v138
    %v142 = vxor.u32 %v141, 2147483648
    %v143 = vsel %vm60, %v142, %v141
    %v144 = vsub.s32 4, %v120
    %v145 = vsel %vm60, %v144, %v120
    %v146 = vsel %vm59, %v57, %v143
    %v147 = vsel %vm59, 0, %v145
    %v148 = vcosq.f32.pop %v146
    %v149 = vsinq.f32.pop %v146
    %vm150 = vweird.f32 %v57
    %v151 = vadd.s32 %v147, 3
    %v152 = vand.u32 %v151, 3
    %vm153 = vcmp.lt.s32.totalorder %v152, 2
    %vm154 = vcmp.eq.s32.totalorder %v152, 0
    %v155 = vxor.u32 %v149, 2147483648
    %v156 = vsel %vm154, %v148, %v155
    %vm157 = vcmp.eq.s32.totalorder %v152, 2
    %v158 = vxor.u32 %v148, 2147483648
    %v159 = vsel %vm157, %v158, %v149
    %v160 = vsel %vm153, %v156, %v159
    %v161 = vsel %vm150, nan, %v160
    %v162 = vmul.f32 %v161, 3.2
    %163 = vst [vmem:[#allocation5] sm:$0x3] %v162
    // Predicated region
    $region18: #{tpu_custom_call.1} parent=1 // pred_check
      _
    $region19: #{tpu_custom_call.1} parent=1 // pred_check_branch
      %165 = sbr.rel (0) target = $region21
    $region20: #{tpu_custom_call.1} parent=1 // pred_region
      %s167 = ssub.s32 32, 32
      %168 = vsyncadd [#allocation4], %s167
      %s170 = sshll.u32 [#allocation5], 4
      %s171 = int_to_ptr.vmem [resolvable:$true] %s170
      %173 = dma.vmem_to_hbm [thread:$0]  %s171, 32, %s3, [#allocation4]
    $region21: #{tpu_custom_call.1} parent=1 // pred_fallthru
      _
    // Predicated region
    $region22: #{tpu_custom_call.1} parent=1 // pred_check
      _
    $region23: #{tpu_custom_call.1} parent=1 // pred_check_branch
      %175 = sbr.rel (0) target = $region25
    $region24: #{tpu_custom_call.1} parent=1 // pred_region
      %176 = dma.done [#allocation4], 32
    $region25: #{tpu_custom_call.1} parent=1 // pred_fallthru
      _
    %177 = vsyncpa [#allocation3], 1
    %178 = vsyncpa [#allocation4], 1

</llo_original>
